<compile_context>
chip_gen: v6e
topology: v6e:2x2x1
jax: 0.10.0
libtpu: 0.0.40
codegen_flags: <defaults>
</compile_context>

<pallas_src>
import numpy as np
import jax
import jax.numpy as jnp
from jax import lax
from jax.experimental import pallas as pl
from jax.experimental.pallas import tpu as pltpu


def _round_up(x: int, m: int) -> int:
    return ((x + m - 1) // m) * m


# ------------------------------ basis builder --------------------------------

def _mdct_basis_np(frame_len: int) -> np.ndarray:
    """Window-folded MDCT basis, (frame_len, N), float64 (host-side numpy)."""
    N = frame_len // 2
    n0 = (N + 1) / 2.0
    n = np.arange(frame_len, dtype=np.float64)
    k = np.arange(N, dtype=np.float64)
    # scipy.signal.cosine(frame_len) == sin(pi * (n + 0.5) / frame_len)
    window = np.sin(np.pi * (n + 0.5) / frame_len)
    return np.sqrt(2.0 / N) * window[:, None] * np.cos(
        np.pi / N * (n[:, None] + n0) * (k[None, :] + 0.5))


# ------------------------------- Pallas kernel --------------------------------

def _mdct_kernel(body_ref, halo_ref, basis_ref, out_ref):
    """MDCT of `tf` consecutive frames as two MXU matmuls.

    body_ref:  (tf, hop)  chunk rows [j*tf, (j+1)*tf) of one batch element
    halo_ref:  (8, hop)   chunk rows starting at (j+1)*tf (only row 0 is used)
    basis_ref: (2*hop, N) resident window-folded cosine basis
    out_ref:   (tf, N)    MDCT coefficients of frames [j*tf, (j+1)*tf)

    Frame l is the concatenation of chunks l and l+1, so
      out[r] = chunk[j*tf+r] @ basis[:hop] + chunk[j*tf+r+1] @ basis[hop:].
    """
    hop = body_ref.shape[-1]
    c0 = body_ref[...]                                       # chunk l  per frame
    c1 = jnp.concatenate([body_ref[1:, :], halo_ref[0:1, :]],
                         axis=0)                             # chunk l+1 per frame
    prec = (lax.Precision.HIGHEST if c0.dtype == jnp.float32
            else lax.Precision.DEFAULT)
    acc = jnp.dot(c0, basis_ref[:hop, :],
                  preferred_element_type=jnp.float32, precision=prec)
    acc = acc + jnp.dot(c1, basis_ref[hop:, :],
                        preferred_element_type=jnp.float32, precision=prec)
    out_ref[...] = acc.astype(out_ref.dtype)


# ------------------------------- MDCT wrapper ---------------------------------

def mdct_pallas(audio: jnp.ndarray, frame_len: int, padding: str = "same",
                compute_dtype=jnp.bfloat16, frame_tile=None) -> jnp.ndarray:
    """audio: (B, T) -> (B, L, N) float32.  Matches the PyTorch MDCT forward.

    compute_dtype=bfloat16 (default) halves the dominant HBM read of this
    memory-bound kernel (f32 MXU accumulation kept).  Pass jnp.float32 for
    reference-grade (~1e-6) accuracy.
    """
    if padding not in ("center", "same"):
        raise ValueError("Padding must be 'center' or 'same'.")
    if frame_len % 2 != 0 or frame_len < 4:
        raise ValueError("frame_len must be an even integer >= 4.")
    B, T = audio.shape
    N = frame_len // 2            # frequency bins
    hop = frame_len // 2          # 50% overlap
    pad = frame_len // 2 if padding == "center" else frame_len // 4
    Tp = T + 2 * pad
    if Tp < frame_len:
        raise ValueError("Audio too short for a single MDCT frame.")
    L = (Tp - frame_len) // hop + 1                       # module's frame count

    csz = np.dtype(compute_dtype).itemsize

    # --- per-step frame tile (tf) ---------------------------------------------
    if frame_tile is None:
        # target ~4 MiB of f32 output per grid step; clamp to [256, 32768] rows
        frame_tile = int(max(256, min(32768, (4 * 2**20) // (4 * N))))

    def vmem_bytes(tf_):
        # double-buffered body/halo/out tiles + (double-buffered) resident basis
        return (2 * (tf_ * hop * csz + 8 * hop * csz + tf_ * N * 4)
                + 2 * frame_len * N * csz)

    cap = max(8, _round_up(min(frame_tile, max(L, 8)), 8))
    while cap > 8 and vmem_bytes(cap) > 48 * 2**20:
        cap = max(8, (cap // 2) // 8 * 8)
    # TODO(synk): for very large N (resident basis >~24 MiB, frame_len >~ 5k on
    # v7x/v5e) also tile the output-bin axis instead of only shrinking the tile.

    if L >= 8:
        # balance the blocks over the grid so boundary waste stays small
        nblk = pl.cdiv(L, cap)
        tf = min(_round_up(pl.cdiv(L, nblk), 8), (L // 8) * 8)
        L_out = L                 # boundary output block store is masked
    else:
        tf, L_out = 8, 8          # tiny input: compute 8 frames, slice afterwards

    num_blocks = pl.cdiv(L_out, tf)

    # --- host-side prep: one fused pad+cast pass, free reshape to chunk rows ---
    # chunk[c] = padded_audio[c*hop:(c+1)*hop];  frame l uses chunks l and l+1.
    NC = _round_up(L + 1, 8) + 8                          # +8 rows of halo slack
    right = NC * hop - T - pad                            # >= module's right pad
    chunks = jnp.pad(audio, ((0, 0), (pad, right))).astype(compute_dtype)
    chunks = chunks.reshape(B, NC, hop)

    basis = jnp.asarray(_mdct_basis_np(frame_len), dtype=compute_dtype)

    tf8 = tf // 8
    halo_cap = (NC - 8) // 8      # last fully in-bounds 8-row halo block index

    cost = pl.CostEstimate(
        flops=2 * B * L_out * frame_len * N,
        transcendentals=0,
        bytes_accessed=int(B * NC * hop * csz + frame_len * N * csz
                           + B * L_out * N * 4),
    )

    out = pl.pallas_call(
        _mdct_kernel,
        out_shape=jax.ShapeDtypeStruct((B, L_out, N), jnp.float32),
        grid_spec=pltpu.PrefetchScalarGridSpec(
            num_scalar_prefetch=0,
            grid=(B, num_blocks),
            in_specs=[
                # body: chunk rows [j*tf, (j+1)*tf) of batch b
                pl.BlockSpec((None, tf, hop), lambda b, j: (b, j, 0)),
                # halo: 8 chunk rows starting at (j+1)*tf (clamped in-bounds;
                # only row 0 is consumed, and only when that frame is real)
                pl.BlockSpec((None, 8, hop),
                             lambda b, j: (b, jnp.minimum((j + 1) * tf8,
                                                          halo_cap), 0)),
                # resident window-folded cosine basis
                pl.BlockSpec((frame_len, N), lambda b, j: (0, 0)),
            ],
            out_specs=pl.BlockSpec((None, tf, N), lambda b, j: (b, j, 0)),
        ),
        compiler_params=pltpu.CompilerParams(
            dimension_semantics=("parallel", "parallel"),
            vmem_limit_bytes=int(min(120 * 2**20,
                                     max(32 * 2**20,
                                         vmem_bytes(tf) + 16 * 2**20))),
        ),
        cost_estimate=cost,
    )(chunks, chunks, basis)

    return out if L_out == L else out[:, :L, :]


# ----------------------------- pure-JAX reference -----------------------------

def mdct_ref(audio: jnp.ndarray, frame_len: int, padding: str = "same") -> jnp.ndarray:
    """Direct transcription of the PyTorch forward (FFT-based), for checking."""
    N = frame_len // 2
    n0 = (N + 1) / 2.0
    hop = frame_len // 2
    pad = frame_len // 2 if padding == "center" else frame_len // 4
    a = jnp.pad(audio, ((0, 0), (pad, pad)))
    L = (a.shape[-1] - frame_len) // hop + 1
    idx = jnp.arange(L)[:, None] * hop + jnp.arange(frame_len)[None, :]
    x = a[:, idx]
    n = jnp.arange(frame_len)
    window = jnp.sin(jnp.pi * (n + 0.5) / frame_len)
    x = x * window
    pre = jnp.exp(-1j * jnp.pi * n / frame_len)
    X = jnp.fft.fft(x * pre, axis=-1)[..., :N]
    post = jnp.exp(-1j * jnp.pi * n0 * (jnp.arange(N) + 0.5) / N)
    res = X * post * np.sqrt(1.0 / N)
    return (jnp.real(res) * np.sqrt(2.0)).astype(jnp.float32)


# ---------------------------------- main ---------------------------------------

if __name__ == "__main__":
    k1, k2, k3, k4 = jax.random.split(jax.random.PRNGKey(0), 4)

    # Case 1: 'same' padding, tiny frames (frame_len=32 -> N=16, hop=16, L=7),
    # float32 compute, tight tolerance.
    fl = 32
    a1 = jax.random.normal(k1, (2, 112), dtype=jnp.float32)
    o1 = jax.block_until_ready(mdct_pallas(a1, fl, "same", compute_dtype=jnp.float32))
    r1 = jax.block_until_ready(mdct_ref(a1, fl, "same"))
    assert o1.shape == r1.shape, (o1.shape, r1.shape)
    np.testing.assert_allclose(np.asarray(o1), np.asarray(r1), atol=1e-4, rtol=1e-4)

    # Case 2: 'center' padding, multi-block grid (L=13), f32 (tight) and
    # default bf16 (loose tolerance, per review).
    a2 = jax.random.normal(k2, (3, 200), dtype=jnp.float32)
    r2 = jax.block_until_ready(mdct_ref(a2, fl, "center"))
    o2f = jax.block_until_ready(mdct_pallas(a2, fl, "center", compute_dtype=jnp.float32))
    assert o2f.shape == r2.shape, (o2f.shape, r2.shape)
    np.testing.assert_allclose(np.asarray(o2f), np.asarray(r2), atol=1e-4, rtol=1e-4)
    o2b = jax.block_until_ready(mdct_pallas(a2, fl, "center"))   # bf16 default
    np.testing.assert_allclose(np.asarray(o2b), np.asarray(r2), atol=1.5e-1, rtol=5e-2)

    # Case 3: lane-dense bins (frame_len=256 -> N=128), default bf16.
    a3 = jax.random.normal(k3, (2, 2000), dtype=jnp.float32)
    r3 = jax.block_until_ready(mdct_ref(a3, 256, "same"))
    o3 = jax.block_until_ready(mdct_pallas(a3, 256, "same"))
    assert o3.shape == r3.shape, (o3.shape, r3.shape)
    np.testing.assert_allclose(np.asarray(o3), np.asarray(r3), atol=1.5e-1, rtol=5e-2)

    # Case 4: exercises clipped boundary input DMA + masked boundary output
    # store (L=170 with two frame blocks of 168), batch of 1, float32.
    a4 = jax.random.normal(k4, (1, 2720), dtype=jnp.float32)
    r4 = jax.block_until_ready(mdct_ref(a4, fl, "same"))
    o4 = jax.block_until_ready(mdct_pallas(a4, fl, "same", compute_dtype=jnp.float32))
    assert o4.shape == r4.shape, (o4.shape, r4.shape)
    np.testing.assert_allclose(np.asarray(o4), np.asarray(r4), atol=1e-4, rtol=1e-4)

    print("KERNEL_OK")
</pallas_src>

<mosaic_0001>
module attributes {stable_mosaic.version = 11 : i64} {
  func.func @_mdct_kernel(%arg0: i32, %arg1: i32, %arg2: memref<1x8x16xf32, #tpu.memory_space<vmem>>, %arg3: memref<1x8x16xf32, #tpu.memory_space<vmem>>, %arg4: memref<32x16xf32, #tpu.memory_space<vmem>>, %arg5: memref<1x8x16xf32, #tpu.memory_space<vmem>>) attributes {dimension_semantics = [#tpu.dimension_semantics<parallel>, #tpu.dimension_semantics<parallel>], iteration_bounds = array<i64: 2, 1>, scalar_prefetch = 0 : i64, scratch_operands = 0 : i64, tpu.core_type = #tpu.core_type<tc>, window_params = [{transform_indices = @transform_0, window_bounds = array<i64: 1, 8, 16>}, {transform_indices = @transform_1, window_bounds = array<i64: 1, 8, 16>}, {pipeline_mode = #tpu.pipeline_mode<synchronous>, transform_indices = @transform_2, window_bounds = array<i64: 32, 16>}, {transform_indices = @transform_3, window_bounds = array<i64: 1, 8, 16>}]} {
    %c0 = arith.constant 0 : index
    %c0_0 = arith.constant 0 : index
    %c0_1 = arith.constant 0 : index
    %0 = vector.load %arg2[%c0, %c0_0, %c0_1] : memref<1x8x16xf32, #tpu.memory_space<vmem>>, vector<1x8x16xf32>
    %1 = vector.shape_cast %0 : vector<1x8x16xf32> to vector<8x16xf32>
    %c0_2 = arith.constant 0 : index
    %c1 = arith.constant 1 : index
    %c0_3 = arith.constant 0 : index
    %2 = vector.load %arg2[%c0_2, %c1, %c0_3] : memref<1x8x16xf32, #tpu.memory_space<vmem>>, vector<1x7x16xf32>
    %3 = vector.shape_cast %2 : vector<1x7x16xf32> to vector<7x16xf32>
    %c0_4 = arith.constant 0 : index
    %c0_5 = arith.constant 0 : index
    %c0_6 = arith.constant 0 : index
    %4 = vector.load %arg3[%c0_4, %c0_5, %c0_6] : memref<1x8x16xf32, #tpu.memory_space<vmem>>, vector<1x1x16xf32>
    %5 = vector.shape_cast %4 : vector<1x1x16xf32> to vector<1x16xf32>
    %6 = tpu.concatenate %3, %5 in 0 : vector<7x16xf32>, vector<1x16xf32> -> vector<8x16xf32>
    %c0_7 = arith.constant 0 : index
    %c0_8 = arith.constant 0 : index
    %7 = vector.load %arg4[%c0_7, %c0_8] : memref<32x16xf32, #tpu.memory_space<vmem>>, vector<16x16xf32>
    %cst = arith.constant dense<0.000000e+00> : vector<8x16xf32>
    %8 = tpu.matmul %1, %7, %cst {dimension_numbers = #tpu.dot_dimension_numbers<[1], [0], [0], [1], [0, 0, 1, 1], [], []>, precision = #tpu.contract_precision<fp32>} : vector<8x16xf32>, vector<16x16xf32>, vector<8x16xf32> -> vector<8x16xf32>
    %c16 = arith.constant 16 : index
    %c0_9 = arith.constant 0 : index
    %9 = vector.load %arg4[%c16, %c0_9] : memref<32x16xf32, #tpu.memory_space<vmem>>, vector<16x16xf32>
    %cst_10 = arith.constant dense<0.000000e+00> : vector<8x16xf32>
    %10 = tpu.matmul %6, %9, %cst_10 {dimension_numbers = #tpu.dot_dimension_numbers<[1], [0], [0], [1], [0, 0, 1, 1], [], []>, precision = #tpu.contract_precision<fp32>} : vector<8x16xf32>, vector<16x16xf32>, vector<8x16xf32> -> vector<8x16xf32>
    %11 = arith.addf %8, %10 : vector<8x16xf32>
    %c0_11 = arith.constant 0 : index
    %c0_12 = arith.constant 0 : index
    %c0_13 = arith.constant 0 : index
    %12 = vector.load %arg5[%c0_11, %c0_12, %c0_13] : memref<1x8x16xf32, #tpu.memory_space<vmem>>, vector<1x8x16xf32>
    %13 = vector.shape_cast %12 : vector<1x8x16xf32> to vector<8x16xf32>
    %14 = vector.shape_cast %11 : vector<8x16xf32> to vector<1x8x16xf32>
    tpu.vector_store %arg5[%c0_11, %c0_12, %c0_13], %14 {strides = array<i32>} : memref<1x8x16xf32, #tpu.memory_space<vmem>>, vector<1x8x16xf32>,
    return
  }
  func.func @transform_0(%arg0: i32, %arg1: i32) -> (i32, i32, i32) {
    %c0_i32 = arith.constant 0 : i32
    %c0_i32_0 = arith.constant 0 : i32
    return %arg0, %arg1, %c0_i32 : i32, i32, i32
  }
  func.func @transform_1(%arg0: i32, %arg1: i32) -> (i32, i32, i32) {
    %c1_i32 = arith.constant 1 : i32
    %0 = arith.addi %arg1, %c1_i32 : i32
    %c1_i32_0 = arith.constant 1 : i32
    %1 = arith.muli %0, %c1_i32_0 : i32
    %c1_i32_1 = arith.constant 1 : i32
    %2 = arith.minsi %1, %c1_i32_1 : i32
    %c0_i32 = arith.constant 0 : i32
    %c0_i32_2 = arith.constant 0 : i32
    return %arg0, %2, %c0_i32 : i32, i32, i32
  }
  func.func @transform_2(%arg0: i32, %arg1: i32) -> (i32, i32) {
    %c0_i32 = arith.constant 0 : i32
    %c0_i32_0 = arith.constant 0 : i32
    %c0_i32_1 = arith.constant 0 : i32
    return %c0_i32, %c0_i32_0 : i32, i32
  }
  func.func @transform_3(%arg0: i32, %arg1: i32) -> (i32, i32, i32) {
    %c0_i32 = arith.constant 0 : i32
    %c0_i32_0 = arith.constant 0 : i32
    return %arg0, %arg1, %c0_i32 : i32, i32, i32
  }
}

</mosaic_0001>

<llo_original>
// kernel: tpu_custom_call.1
$region0: #{tpu_custom_call.1}
  #allocation0 [shape = 'u32[]', space=smem, size = 0x4, offset = 0x4, fixed_abs, tag = 'smem constant byte address 0x4 - core index']
  #allocation1 [shape = 'u32[144,128]{1,0:T(1,128)}', space=vmem, size = 0x12000, scoped, tag = 'internal scratch']
  %s0 = inlined_call_operand.vmem [shape: f32[2,16,16], index: 0, kind: input, shape index: {}]
  %s1 = inlined_call_operand.hbm [shape: f32[2,16,16], index: 1, kind: input, shape index: {}]
  %s2 = inlined_call_operand.vmem [shape: f32[32,16], index: 2, kind: input, shape index: {}]
  %s3 = inlined_call_operand.hbm [shape: f32[2,8,16], index: 3, kind: output, shape index: {}]
  %s4 = sld [smem:[#allocation0]]
  $region49: #{tpu_custom_call.1} parent=0
    _
  %s6 = ssub.s32 1, %s4
  %s7 = scalar_select 0, %s6, %s4
  $region1: #{tpu_custom_call.1} parent=0
    #allocation2 [shape = 'u8[8192]{0}', space=vmem, size = 0x2000, scoped, tag = 'input window, operand 1']
    #allocation3 [shape = 's32[2]{0}', space=sflag, size = 0x8, scoped, tag = 'scoped memory for tpu_custom_call.1']
    #allocation4 [shape = 's32[2]{0}', space=sflag, size = 0x8, scoped, tag = 'scoped memory for tpu_custom_call.1']
    #allocation5 [shape = 'u8[8192]{0}', space=vmem, size = 0x2000, scoped, tag = 'output window, operand 0']
    %8 = vsyncpa [#allocation3], 0
    %s9 = scalar_lea.sflag [#allocation3], 1
    %10 = vsyncpa %s9, 0
    %11 = vsyncpa [#allocation4], 0
    %s12 = scalar_lea.sflag [#allocation4], 1
    %13 = vsyncpa %s12, 0
    loop: start=0, step=1, limit=4
    $region2: #{tpu_custom_call.1} parent=1 // loop_pre_header
      _
    $region3: #{tpu_custom_call.1} parent=1 // loop_header
      %s15 = sphi 0, %s19
      %p16 = scmp.ge.s32.totalorder %s15, 4
      %s22 = sphi 0, %s34
      %s23 = sphi 0, %s30
      %s24 = sphi 0, %s22
      %s25 = sphi 0, %s23
      %s26 = sphi 0, %s24
      %s27 = sphi 0, %s25
      %s39 = sphi 0, %s41
      %s42 = sphi 0, %s39
      %s43 = sphi 0, %s42
      %s59 = sphi 0, %s43
      %s73 = sphi 0, %s75
      %s76 = sphi 0, %s73
      %s77 = sphi 0, %s76
      %s93 = sphi 0, %s77
      %s97 = sphi 0, %s97
      %s99 = sphi 0, %s97
      %s100 = sphi 0, %s99
      %s114 = sphi 0, %s100
      %s122 = sphi 0, %s124
      %s125 = sphi 0, %s122
      %s126 = sphi 0, %s125
      %s142 = sphi 0, %s126
    $region4: #{tpu_custom_call.1} parent=1 // loop_header_branch
      %18 = sbr.rel (%p16) target = $region8
    $region5: #{tpu_custom_call.1} parent=1 // loop_body
      %s20 = ssub.s32 %s15, 1
      %s21 = ssub.s32 %s15, 2
      %s28 = sadd.s32 1, %s23
      %p29 = scmp.ge.s32.totalorder %s28, 1
      %s30 = scalar_select %p29, 0, %s28
      %s31 = sadd.s32 1, %s22
      %s32 = scalar_select %p29, %s31, %s22
      %p33 = scmp.ge.s32.totalorder %s32, 2
      %s34 = scalar_select %p33, 0, %s32
      %s35 = ssub.s32 %s22, %s34
      %s36 = ssub.s32 %s23, %s30
      %s37 = sor.u32 %s35, %s36
      %p38 = scmp.eq.s32.totalorder %s37, 0
      %s40 = sadd.s32 %s39, 1
      %s41 = scalar_select %p38, %s39, %s40
      %p44 = pneg %p38
      %p45 = scmp.eq.s32.totalorder %s15, 1
      %p46 = por %p44, %p45
      %p47 = scmp.ne.s32.totalorder %s39, %s42
      %p48 = scmp.eq.s32.totalorder %s15, 0
      %p49 = por %p47, %p48
      %p50 = scmp.ne.s32.totalorder %s39, %s42
      %p51 = scmp.eq.s32.totalorder %s20, 1
      %p52 = por %p50, %p51
      %p53 = scmp.ne.s32.totalorder %s42, %s43
      %p54 = scmp.eq.s32.totalorder %s20, 0
      %p55 = por %p53, %p54
      %p56 = scmp.ne.s32.totalorder %s42, %s43
      %p57 = scmp.eq.s32.totalorder %s21, 1
      %p58 = por %p56, %p57
      %p60 = scmp.ne.s32.totalorder %s43, %s59
      %p61 = scmp.eq.s32.totalorder %s21, 0
      %p62 = por %p60, %p61
      %s63 = sadd.s32 %s23, 1
      %p64 = scmp.lt.s32.totalorder %s63, 1
      %s65 = scalar_select %p64, %s63, 1
      %s66 = sadd.s32 %s30, 1
      %p67 = scmp.lt.s32.totalorder %s66, 1
      %s68 = scalar_select %p67, %s66, 1
      %s69 = ssub.s32 %s22, %s34
      %s70 = ssub.s32 %s65, %s68
      %s71 = sor.u32 %s69, %s70
      %p72 = scmp.eq.s32.totalorder %s71, 0
      %s74 = sadd.s32 %s73, 1
      %s75 = scalar_select %p72, %s73, %s74
      %p78 = pneg %p72
      %p79 = scmp.eq.s32.totalorder %s15, 1
      %p80 = por %p78, %p79
      %p81 = scmp.ne.s32.totalorder %s73, %s76
      %p82 = scmp.eq.s32.totalorder %s15, 0
      %p83 = por %p81, %p82
      %p84 = scmp.ne.s32.totalorder %s73, %s76
      %p85 = scmp.eq.s32.totalorder %s20, 1
      %p86 = por %p84, %p85
      %p87 = scmp.ne.s32.totalorder %s76, %s77
      %p88 = scmp.eq.s32.totalorder %s20, 0
      %p89 = por %p87, %p88
      %p90 = scmp.ne.s32.totalorder %s76, %s77
      %p91 = scmp.eq.s32.totalorder %s21, 1
      %p92 = por %p90, %p91
      %p94 = scmp.ne.s32.totalorder %s77, %s93
      %p95 = scmp.eq.s32.totalorder %s21, 0
      %p96 = por %p94, %p95
      %s98 = sadd.s32 %s97, 1
      %p101 = scmp.eq.s32.totalorder %s15, 1
      %p102 = scmp.ne.s32.totalorder %s97, %s99
      %p103 = scmp.eq.s32.totalorder %s15, 0
      %p104 = por %p102, %p103
      %p105 = scmp.ne.s32.totalorder %s97, %s99
      %p106 = scmp.eq.s32.totalorder %s20, 1
      %p107 = por %p105, %p106
      %p108 = scmp.ne.s32.totalorder %s99, %s100
      %p109 = scmp.eq.s32.totalorder %s20, 0
      %p110 = por %p108, %p109
      %p111 = scmp.ne.s32.totalorder %s99, %s100
      %p112 = scmp.eq.s32.totalorder %s21, 1
      %p113 = por %p111, %p112
      %p115 = scmp.ne.s32.totalorder %s100, %s114
      %p116 = scmp.eq.s32.totalorder %s21, 0
      %p117 = por %p115, %p116
      %s118 = ssub.s32 %s22, %s34
      %s119 = ssub.s32 %s23, %s30
      %s120 = sor.u32 %s118, %s119
      %p121 = scmp.eq.s32.totalorder %s120, 0
      %s123 = sadd.s32 %s122, 1
      %s124 = scalar_select %p121, %s122, %s123
      %p127 = pneg %p121
      %p128 = scmp.eq.s32.totalorder %s15, 1
      %p129 = por %p127, %p128
      %p130 = scmp.ne.s32.totalorder %s122, %s125
      %p131 = scmp.eq.s32.totalorder %s15, 0
      %p132 = por %p130, %p131
      %p133 = scmp.ne.s32.totalorder %s122, %s125
      %p134 = scmp.eq.s32.totalorder %s20, 1
      %p135 = por %p133, %p134
      %p136 = scmp.ne.s32.totalorder %s125, %s126
      %p137 = scmp.eq.s32.totalorder %s20, 0
      %p138 = por %p136, %p137
      %p139 = scmp.ne.s32.totalorder %s125, %s126
      %p140 = scmp.eq.s32.totalorder %s21, 1
      %p141 = por %p139, %p140
      %p143 = scmp.ne.s32.totalorder %s126, %s142
      %p144 = scmp.eq.s32.totalorder %s21, 0
      %p145 = por %p143, %p144
      %p146 = scmp.le.s32.totalorder 1, %s15
      %p147 = scmp.lt.s32.totalorder %s15, 3
      %p148 = pnand %p146, %p147
      %p149 = pneg %p148
      // Predicated region
      $region9: #{tpu_custom_call.1} parent=5 // pred_check
        _
      $region10: #{tpu_custom_call.1} parent=5 // pred_check_branch
        %151 = sbr.rel (%p148) target = $region12
      $region11: #{tpu_custom_call.1} parent=5 // pred_region
        %s152 = ssub.s32 %s15, 1
        // Predicated region
        $region13: #{tpu_custom_call.1} parent=11 // pred_check
          %p153 = pneg %p110
        $region14: #{tpu_custom_call.1} parent=11 // pred_check_branch
          %155 = sbr.rel (%p153) target = $region16
        $region15: #{tpu_custom_call.1} parent=11 // pred_region
          _
        $region16: #{tpu_custom_call.1} parent=11 // pred_fallthru
          _
      $region12: #{tpu_custom_call.1} parent=5 // pred_fallthru
        _
      %p156 = scmp.lt.s32.totalorder %s15, 2
      // Predicated region
      $region17: #{tpu_custom_call.1} parent=5 // pred_check
        %p157 = pneg %p156
      $region18: #{tpu_custom_call.1} parent=5 // pred_check_branch
        %159 = sbr.rel (%p157) target = $region20
      $region19: #{tpu_custom_call.1} parent=5 // pred_region
        // Predicated region
        $region21: #{tpu_custom_call.1} parent=19 // pred_check
          %p160 = pneg %p49
        $region22: #{tpu_custom_call.1} parent=19 // pred_check_branch
          %162 = sbr.rel (%p160) target = $region24
        $region23: #{tpu_custom_call.1} parent=19 // pred_region
          %p163 = scmp.lt.s32.totalorder %s22, 1
          %s164 = scalar_select %p163, %s22, 1
          %p165 = scmp.lt.s32.totalorder %s23, 1
          %s166 = scalar_select %p165, %s23, 1
          %s167 = smul.addr %s164, 2
          %s168 = sadd.s32 %s166, %s167
          %s169 = smul.addr %s168, 8
          %s170 = scalar_lea.vmem %s0, %s169
        $region24: #{tpu_custom_call.1} parent=19 // pred_fallthru
          _
        // Predicated region
        $region25: #{tpu_custom_call.1} parent=19 // pred_check
          %p171 = pneg %p83
        $region26: #{tpu_custom_call.1} parent=19 // pred_check_branch
          %173 = sbr.rel (%p171) target = $region28
        $region27: #{tpu_custom_call.1} parent=19 // pred_region
          %s174 = sand.u32 %s73, 1
          %s175 = scalar_lea.sflag [#allocation3], %s174
          %s176 = sand.u32 %s73, 1
          %s177 = smul.addr %s176, 8
          %s178 = scalar_lea.vmem [#allocation2], %s177
          %s179 = sadd.s32 %s23, 1
          %p180 = scmp.lt.s32.totalorder %s179, 1
          %s181 = scalar_select %p180, %s179, 1
          %s183 = ssub.s32 128, 128
          %184 = vsyncadd %s175, %s183
          %s185 = smul.addr %s22, 2
          %s186 = sadd.s32 %s181, %s185
          %s187 = smul.addr %s186, 128
          %s188 = scalar_lea.hbm %s1, %s187
          %s190 = sshll.u32 %s178, 4
          %s191 = int_to_ptr.vmem [resolvable:$true] %s190
          %193 = dma.hbm_to_vmem [thread:$0]  %s188, 128, %s191, %s175
        $region28: #{tpu_custom_call.1} parent=19 // pred_fallthru
          _
      $region20: #{tpu_custom_call.1} parent=5 // pred_fallthru
        _
      %p194 = scmp.le.s32.totalorder 1, %s15
      %p195 = scmp.lt.s32.totalorder %s15, 3
      %p196 = pnand %p194, %p195
      %p197 = pneg %p196
      // Predicated region
      $region29: #{tpu_custom_call.1} parent=5 // pred_check
        _
      $region30: #{tpu_custom_call.1} parent=5 // pred_check_branch
        %199 = sbr.rel (%p196) target = $region32
      $region31: #{tpu_custom_call.1} parent=5 // pred_region
        %s200 = ssub.s32 %s15, 1
        %s201 = sand.u32 %s76, 1
        %s202 = scalar_lea.sflag [#allocation3], %s201
        %s203 = sand.u32 %s76, 1
        %s204 = smul.addr %s203, 8
        %s205 = scalar_lea.vmem [#allocation2], %s204
        // Predicated region
        $region33: #{tpu_custom_call.1} parent=31 // pred_check
          %p206 = pneg %p89
        $region34: #{tpu_custom_call.1} parent=31 // pred_check_branch
          %208 = sbr.rel (%p206) target = $region36
        $region35: #{tpu_custom_call.1} parent=31 // pred_region
          %209 = dma.done %s202, 128
        $region36: #{tpu_custom_call.1} parent=31 // pred_fallthru
          _
        %p210 = scmp.lt.s32.totalorder %s24, 1
        %s211 = scalar_select %p210, %s24, 1
        %p212 = scmp.lt.s32.totalorder %s25, 1
        %s213 = scalar_select %p212, %s25, 1
        %s214 = smul.addr %s211, 2
        %s215 = sadd.s32 %s213, %s214
        %s216 = smul.addr %s215, 8
        %s217 = scalar_lea.vmem %s0, %s216
        %p218 = pneg %p55
        %p219 = pneg %p52
        %s220 = sand.u32 %s76, 1
        %s221 = scalar_lea.sflag [#allocation3], %s220
        %s222 = sand.u32 %s76, 1
        %s223 = smul.addr %s222, 8
        %s224 = scalar_lea.vmem [#allocation2], %s223
        %p225 = pneg %p89
        %p226 = pneg %p86
        %p227 = pneg %p110
        %p228 = pneg %p107
        %p229 = pneg %p138
        %p230 = pneg %p135
        %s231 = sand.u32 %s125, 1
        %s232 = scalar_lea.sflag [#allocation4], %s231
        %s233 = sand.u32 %s125, 1
        %s234 = smul.addr %s233, 8
        %s235 = scalar_lea.vmem [#allocation5], %s234
        %p236 = scmp.lt.s32.totalorder %s24, 1
        %s237 = scalar_select %p236, %s24, 1
        %p238 = scmp.lt.s32.totalorder %s25, 1
        %s239 = scalar_select %p238, %s25, 1
        %s240 = smul.addr %s237, 2
        %s241 = sadd.s32 %s239, %s240
        %s242 = smul.addr %s241, 8
        %s243 = scalar_lea.vmem %s0, %s242
        %s244 = sadd.s32 %s25, 1
        %p245 = scmp.lt.s32.totalorder %s244, 1
        %s246 = scalar_select %p245, %s244, 1
        %v247 = vld [vmem:[%s243] sm:$0xff]
        %v248 = vld [vmem:[%s243 + $0x1] sm:$0x7f]
        %v249 = vld [vmem:[%s205] sm:$0x1]
        %v251 = vrot.slane %v249, 1
        %vm253 = vcmask 1046528
        %v254 = vsel %vm253, %v248, %v251
        %v255 = vld [vmem:[%s2] sm:$0xff]
        %v256 = vld [vmem:[%s2 + $0x8] sm:$0xff]
        %v257 = vld [vmem:[%s2 + $0x10] sm:$0xff]
        %v258 = vld [vmem:[%s2 + $0x18] sm:$0xff]
        %vm259 = vcmask 130048
        %v261 = vsel %vm259, %v254, 0
        %263 = vmatprep.subr.mxu0 0.0
        %264 = vmatpush1.msra.mxu0 0.0
        %265 = vmatprep.subr.mxu0 0.0
        %266 = vmatpush1.msra.mxu0 0.0
        %267 = vmatprep.subr.mxu0 0.0
        %268 = vmatpush1.msra.mxu0 0.0
        %269 = vmatprep.subr.mxu0 0.0
        %270 = vmatpush1.msra.mxu0 0.0
        %271 = vmatprep.subr.mxu0 0.0
        %272 = vmatpush1.msra.mxu0 0.0
        %273 = vmatprep.subr.mxu0 0.0
        %274 = vmatpush1.msra.mxu0 0.0
        %275 = vmatprep.subr.mxu0 0.0
        %276 = vmatpush1.msra.mxu0 0.0
        %277 = vmatprep.subr.mxu0 0.0
        %278 = vmatpush1.msra.mxu0 0.0
        %279 = vmatprep.subr.mxu0 0.0
        %280 = vmatpush1.msra.mxu0 0.0
        %281 = vmatprep.subr.mxu0 0.0
        %282 = vmatpush1.msra.mxu0 0.0
        %283 = vmatprep.subr.mxu0 0.0
        %284 = vmatpush1.msra.mxu0 0.0
        %285 = vmatprep.subr.mxu0 0.0
        %286 = vmatpush1.msra.mxu0 0.0
        %287 = vmatprep.subr.mxu0 0.0
        %288 = vmatpush1.msra.mxu0 0.0
        %289 = vmatprep.subr.mxu0 0.0
        %290 = vmatpush1.msra.mxu0 0.0
        %291 = vmatprep.subr.mxu0 0.0
        %v292 = vand.u32 %v258, 4294901760
        %293 = vmatpush1.msra.mxu0 %v292
        %294 = vmatprep.subr.mxu0 0.0
        %v295 = vand.u32 %v257, 4294901760
        %296 = vmatpush1.msra.mxu0 %v295
        %297 = vmatprep.subr.mxu0 0.0
        %298 = vmatpush2.msra.mxu0 0.0
        %299 = vmatprep.subr.mxu0 0.0
        %300 = vmatpush2.msra.mxu0 0.0
        %301 = vmatprep.subr.mxu0 0.0
        %302 = vmatpush2.msra.mxu0 0.0
        %303 = vmatprep.subr.mxu0 0.0
        %304 = vmatpush2.msra.mxu0 0.0
        %305 = vmatprep.subr.mxu0 0.0
        %306 = vmatpush2.msra.mxu0 0.0
        %307 = vmatprep.subr.mxu0 0.0
        %308 = vmatpush2.msra.mxu0 0.0
        %309 = vmatprep.subr.mxu0 0.0
        %310 = vmatpush2.msra.mxu0 0.0
        %311 = vmatprep.subr.mxu0 0.0
        %312 = vmatpush2.msra.mxu0 0.0
        %313 = vmatprep.subr.mxu0 0.0
        %314 = vmatpush2.msra.mxu0 0.0
        %315 = vmatprep.subr.mxu0 0.0
        %316 = vmatpush2.msra.mxu0 0.0
        %317 = vmatprep.subr.mxu0 0.0
        %318 = vmatpush2.msra.mxu0 0.0
        %319 = vmatprep.subr.mxu0 0.0
        %320 = vmatpush2.msra.mxu0 0.0
        %321 = vmatprep.subr.mxu0 0.0
        %322 = vmatpush2.msra.mxu0 0.0
        %323 = vmatprep.subr.mxu0 0.0
        %324 = vmatpush2.msra.mxu0 0.0
        %325 = vmatprep.subr.mxu0 0.0
        %326 = vmatpush2.msra.mxu0 0.0
        %327 = vmatprep.subr.mxu0 0.0
        %328 = vmatpush2.msra.mxu0 0.0
        %329 = vmatprep.mubr.f32.mxu0 0.0
        %v330 = vand.u32 %v261, 4294901760
        %v331 = vsub.f32 %v261, %v330
        %v332 = vand.u32 %v331, 4294901760
        %v333 = vsub.f32 %v331, %v332
        %v334 = vand.u32 %v333, 4294901760
        %335 = vmatmul.mubr.f32.gmra.mxu0 %v334
        %v336 = vpop.f32.mrf.mxu0
        %v337 = vadd.f32 0.0, %v336
        %v338 = vpop.f32.mrf.mxu0
        %339 = vdwg.mxu0
        %340 = vmatprep.subr.mxu0 0.0
        %341 = vmatpush1.msra.mxu0 0.0
        %342 = vmatprep.subr.mxu0 0.0
        %343 = vmatpush1.msra.mxu0 0.0
        %344 = vmatprep.subr.mxu0 0.0
        %345 = vmatpush1.msra.mxu0 0.0
        %346 = vmatprep.subr.mxu0 0.0
        %347 = vmatpush1.msra.mxu0 0.0
        %348 = vmatprep.subr.mxu0 0.0
        %349 = vmatpush1.msra.mxu0 0.0
        %350 = vmatprep.subr.mxu0 0.0
        %351 = vmatpush1.msra.mxu0 0.0
        %352 = vmatprep.subr.mxu0 0.0
        %353 = vmatpush1.msra.mxu0 0.0
        %354 = vmatprep.subr.mxu0 0.0
        %355 = vmatpush1.msra.mxu0 0.0
        %356 = vmatprep.subr.mxu0 0.0
        %357 = vmatpush1.msra.mxu0 0.0
        %358 = vmatprep.subr.mxu0 0.0
        %359 = vmatpush1.msra.mxu0 0.0
        %360 = vmatprep.subr.mxu0 0.0
        %361 = vmatpush1.msra.mxu0 0.0
        %362 = vmatprep.subr.mxu0 0.0
        %363 = vmatpush1.msra.mxu0 0.0
        %364 = vmatprep.subr.mxu0 0.0
        %365 = vmatpush1.msra.mxu0 0.0
        %366 = vmatprep.subr.mxu0 0.0
        %367 = vmatpush1.msra.mxu0 0.0
        %368 = vmatprep.subr.mxu0 0.0
        %v369 = vand.u32 %v258, 4294901760
        %v370 = vsub.f32 %v258, %v369
        %v371 = vand.u32 %v370, 4294901760
        %v372 = vsub.f32 %v370, %v371
        %v373 = vand.u32 %v372, 4294901760
        %374 = vmatpush1.msra.mxu0 %v373
        %375 = vmatprep.subr.mxu0 0.0
        %v376 = vand.u32 %v257, 4294901760
        %v377 = vsub.f32 %v257, %v376
        %v378 = vand.u32 %v377, 4294901760
        %v379 = vsub.f32 %v377, %v378
        %v380 = vand.u32 %v379, 4294901760
        %381 = vmatpush1.msra.mxu0 %v380
        %382 = vmatprep.subr.mxu0 0.0
        %383 = vmatpush2.msra.mxu0 0.0
        %384 = vmatprep.subr.mxu0 0.0
        %385 = vmatpush2.msra.mxu0 0.0
        %386 = vmatprep.subr.mxu0 0.0
        %387 = vmatpush2.msra.mxu0 0.0
        %388 = vmatprep.subr.mxu0 0.0
        %389 = vmatpush2.msra.mxu0 0.0
        %390 = vmatprep.subr.mxu0 0.0
        %391 = vmatpush2.msra.mxu0 0.0
        %392 = vmatprep.subr.mxu0 0.0
        %393 = vmatpush2.msra.mxu0 0.0
        %394 = vmatprep.subr.mxu0 0.0
        %395 = vmatpush2.msra.mxu0 0.0
        %396 = vmatprep.subr.mxu0 0.0
        %397 = vmatpush2.msra.mxu0 0.0
        %398 = vmatprep.subr.mxu0 0.0
        %399 = vmatpush2.msra.mxu0 0.0
        %400 = vmatprep.subr.mxu0 0.0
        %401 = vmatpush2.msra.mxu0 0.0
        %402 = vmatprep.subr.mxu0 0.0
        %403 = vmatpush2.msra.mxu0 0.0
        %404 = vmatprep.subr.mxu0 0.0
        %405 = vmatpush2.msra.mxu0 0.0
        %406 = vmatprep.subr.mxu0 0.0
        %407 = vmatpush2.msra.mxu0 0.0
        %408 = vmatprep.subr.mxu0 0.0
        %409 = vmatpush2.msra.mxu0 0.0
        %410 = vmatprep.subr.mxu0 0.0
        %411 = vmatpush2.msra.mxu0 0.0
        %412 = vmatprep.subr.mxu0 0.0
        %413 = vmatpush2.msra.mxu0 0.0
        %414 = vmatprep.mubr.f32.mxu0 0.0
        %v415 = vand.u32 %v261, 4294901760
        %416 = vmatmul.mubr.f32.gmra.mxu0 %v415
        %v417 = vpop.f32.mrf.mxu0
        %v418 = vadd.f32 %v337, %v417
        %v419 = vpop.f32.mrf.mxu0
        %420 = vdwg.mxu0
        %421 = vmatprep.subr.mxu0 0.0
        %422 = vmatpush1.msra.mxu0 0.0
        %423 = vmatprep.subr.mxu0 0.0
        %424 = vmatpush1.msra.mxu0 0.0
        %425 = vmatprep.subr.mxu0 0.0
        %426 = vmatpush1.msra.mxu0 0.0
        %427 = vmatprep.subr.mxu0 0.0
        %428 = vmatpush1.msra.mxu0 0.0
        %429 = vmatprep.subr.mxu0 0.0
        %430 = vmatpush1.msra.mxu0 0.0
        %431 = vmatprep.subr.mxu0 0.0
        %432 = vmatpush1.msra.mxu0 0.0
        %433 = vmatprep.subr.mxu0 0.0
        %434 = vmatpush1.msra.mxu0 0.0
        %435 = vmatprep.subr.mxu0 0.0
        %436 = vmatpush1.msra.mxu0 0.0
        %437 = vmatprep.subr.mxu0 0.0
        %438 = vmatpush1.msra.mxu0 0.0
        %439 = vmatprep.subr.mxu0 0.0
        %440 = vmatpush1.msra.mxu0 0.0
        %441 = vmatprep.subr.mxu0 0.0
        %442 = vmatpush1.msra.mxu0 0.0
        %443 = vmatprep.subr.mxu0 0.0
        %444 = vmatpush1.msra.mxu0 0.0
        %445 = vmatprep.subr.mxu0 0.0
        %446 = vmatpush1.msra.mxu0 0.0
        %447 = vmatprep.subr.mxu0 0.0
        %448 = vmatpush1.msra.mxu0 0.0
        %449 = vmatprep.subr.mxu0 0.0
        %v450 = vand.u32 %v258, 4294901760
        %v451 = vsub.f32 %v258, %v450
        %452 = vmatpush1.msra.mxu0 %v451
        %453 = vmatprep.subr.mxu0 0.0
        %v454 = vand.u32 %v257, 4294901760
        %v455 = vsub.f32 %v257, %v454
        %456 = vmatpush1.msra.mxu0 %v455
        %457 = vmatprep.subr.mxu0 0.0
        %458 = vmatpush2.msra.mxu0 0.0
        %459 = vmatprep.subr.mxu0 0.0
        %460 = vmatpush2.msra.mxu0 0.0
        %461 = vmatprep.subr.mxu0 0.0
        %462 = vmatpush2.msra.mxu0 0.0
        %463 = vmatprep.subr.mxu0 0.0
        %464 = vmatpush2.msra.mxu0 0.0
        %465 = vmatprep.subr.mxu0 0.0
        %466 = vmatpush2.msra.mxu0 0.0
        %467 = vmatprep.subr.mxu0 0.0
        %468 = vmatpush2.msra.mxu0 0.0
        %469 = vmatprep.subr.mxu0 0.0
        %470 = vmatpush2.msra.mxu0 0.0
        %471 = vmatprep.subr.mxu0 0.0
        %472 = vmatpush2.msra.mxu0 0.0
        %473 = vmatprep.subr.mxu0 0.0
        %474 = vmatpush2.msra.mxu0 0.0
        %475 = vmatprep.subr.mxu0 0.0
        %476 = vmatpush2.msra.mxu0 0.0
        %477 = vmatprep.subr.mxu0 0.0
        %478 = vmatpush2.msra.mxu0 0.0
        %479 = vmatprep.subr.mxu0 0.0
        %480 = vmatpush2.msra.mxu0 0.0
        %481 = vmatprep.subr.mxu0 0.0
        %482 = vmatpush2.msra.mxu0 0.0
        %483 = vmatprep.subr.mxu0 0.0
        %484 = vmatpush2.msra.mxu0 0.0
        %485 = vmatprep.subr.mxu0 0.0
        %486 = vmatpush2.msra.mxu0 0.0
        %487 = vmatprep.subr.mxu0 0.0
        %488 = vmatpush2.msra.mxu0 0.0
        %489 = vmatprep.mubr.f32.mxu0 0.0
        %v490 = vand.u32 %v261, 4294901760
        %v491 = vsub.f32 %v261, %v490
        %492 = vmatmul.mubr.f32.gmra.mxu0 %v491
        %v493 = vpop.f32.mrf.mxu0
        %v494 = vadd.f32 %v418, %v493
        %v495 = vpop.f32.mrf.mxu0
        %496 = vdwg.mxu0
        %497 = vmatprep.subr.mxu0 0.0
        %498 = vmatpush1.msra.mxu0 0.0
        %499 = vmatprep.subr.mxu0 0.0
        %500 = vmatpush1.msra.mxu0 0.0
        %501 = vmatprep.subr.mxu0 0.0
        %502 = vmatpush1.msra.mxu0 0.0
        %503 = vmatprep.subr.mxu0 0.0
        %504 = vmatpush1.msra.mxu0 0.0
        %505 = vmatprep.subr.mxu0 0.0
        %506 = vmatpush1.msra.mxu0 0.0
        %507 = vmatprep.subr.mxu0 0.0
        %508 = vmatpush1.msra.mxu0 0.0
        %509 = vmatprep.subr.mxu0 0.0
        %510 = vmatpush1.msra.mxu0 0.0
        %511 = vmatprep.subr.mxu0 0.0
        %512 = vmatpush1.msra.mxu0 0.0
        %513 = vmatprep.subr.mxu0 0.0
        %514 = vmatpush1.msra.mxu0 0.0
        %515 = vmatprep.subr.mxu0 0.0
        %516 = vmatpush1.msra.mxu0 0.0
        %517 = vmatprep.subr.mxu0 0.0
        %518 = vmatpush1.msra.mxu0 0.0
        %519 = vmatprep.subr.mxu0 0.0
        %520 = vmatpush1.msra.mxu0 0.0
        %521 = vmatprep.subr.mxu0 0.0
        %522 = vmatpush1.msra.mxu0 0.0
        %523 = vmatprep.subr.mxu0 0.0
        %524 = vmatpush1.msra.mxu0 0.0
        %525 = vmatprep.subr.mxu0 0.0
        %v526 = vand.u32 %v258, 4294901760
        %527 = vmatpush1.msra.mxu0 %v526
        %528 = vmatprep.subr.mxu0 0.0
        %v529 = vand.u32 %v257, 4294901760
        %530 = vmatpush1.msra.mxu0 %v529
        %531 = vmatprep.subr.mxu0 0.0
        %532 = vmatpush2.msra.mxu0 0.0
        %533 = vmatprep.subr.mxu0 0.0
        %534 = vmatpush2.msra.mxu0 0.0
        %535 = vmatprep.subr.mxu0 0.0
        %536 = vmatpush2.msra.mxu0 0.0
        %537 = vmatprep.subr.mxu0 0.0
        %538 = vmatpush2.msra.mxu0 0.0
        %539 = vmatprep.subr.mxu0 0.0
        %540 = vmatpush2.msra.mxu0 0.0
        %541 = vmatprep.subr.mxu0 0.0
        %542 = vmatpush2.msra.mxu0 0.0
        %543 = vmatprep.subr.mxu0 0.0
        %544 = vmatpush2.msra.mxu0 0.0
        %545 = vmatprep.subr.mxu0 0.0
        %546 = vmatpush2.msra.mxu0 0.0
        %547 = vmatprep.subr.mxu0 0.0
        %548 = vmatpush2.msra.mxu0 0.0
        %549 = vmatprep.subr.mxu0 0.0
        %550 = vmatpush2.msra.mxu0 0.0
        %551 = vmatprep.subr.mxu0 0.0
        %552 = vmatpush2.msra.mxu0 0.0
        %553 = vmatprep.subr.mxu0 0.0
        %554 = vmatpush2.msra.mxu0 0.0
        %555 = vmatprep.subr.mxu0 0.0
        %556 = vmatpush2.msra.mxu0 0.0
        %557 = vmatprep.subr.mxu0 0.0
        %558 = vmatpush2.msra.mxu0 0.0
        %559 = vmatprep.subr.mxu0 0.0
        %560 = vmatpush2.msra.mxu0 0.0
        %561 = vmatprep.subr.mxu0 0.0
        %562 = vmatpush2.msra.mxu0 0.0
        %563 = vmatprep.mubr.f32.mxu0 0.0
        %v564 = vand.u32 %v261, 4294901760
        %v565 = vsub.f32 %v261, %v564
        %v566 = vand.u32 %v565, 4294901760
        %567 = vmatmul.mubr.f32.gmra.mxu0 %v566
        %v568 = vpop.f32.mrf.mxu0
        %v569 = vadd.f32 %v494, %v568
        %v570 = vpop.f32.mrf.mxu0
        %571 = vdwg.mxu0
        %572 = vmatprep.subr.mxu0 0.0
        %573 = vmatpush1.msra.mxu0 0.0
        %574 = vmatprep.subr.mxu0 0.0
        %575 = vmatpush1.msra.mxu0 0.0
        %576 = vmatprep.subr.mxu0 0.0
        %577 = vmatpush1.msra.mxu0 0.0
        %578 = vmatprep.subr.mxu0 0.0
        %579 = vmatpush1.msra.mxu0 0.0
        %580 = vmatprep.subr.mxu0 0.0
        %581 = vmatpush1.msra.mxu0 0.0
        %582 = vmatprep.subr.mxu0 0.0
        %583 = vmatpush1.msra.mxu0 0.0
        %584 = vmatprep.subr.mxu0 0.0
        %585 = vmatpush1.msra.mxu0 0.0
        %586 = vmatprep.subr.mxu0 0.0
        %587 = vmatpush1.msra.mxu0 0.0
        %588 = vmatprep.subr.mxu0 0.0
        %589 = vmatpush1.msra.mxu0 0.0
        %590 = vmatprep.subr.mxu0 0.0
        %591 = vmatpush1.msra.mxu0 0.0
        %592 = vmatprep.subr.mxu0 0.0
        %593 = vmatpush1.msra.mxu0 0.0
        %594 = vmatprep.subr.mxu0 0.0
        %595 = vmatpush1.msra.mxu0 0.0
        %596 = vmatprep.subr.mxu0 0.0
        %597 = vmatpush1.msra.mxu0 0.0
        %598 = vmatprep.subr.mxu0 0.0
        %599 = vmatpush1.msra.mxu0 0.0
        %600 = vmatprep.subr.mxu0 0.0
        %v601 = vand.u32 %v258, 4294901760
        %v602 = vsub.f32 %v258, %v601
        %v603 = vand.u32 %v602, 4294901760
        %604 = vmatpush1.msra.mxu0 %v603
        %605 = vmatprep.subr.mxu0 0.0
        %v606 = vand.u32 %v257, 4294901760
        %v607 = vsub.f32 %v257, %v606
        %v608 = vand.u32 %v607, 4294901760
        %609 = vmatpush1.msra.mxu0 %v608
        %610 = vmatprep.subr.mxu0 0.0
        %611 = vmatpush2.msra.mxu0 0.0
        %612 = vmatprep.subr.mxu0 0.0
        %613 = vmatpush2.msra.mxu0 0.0
        %614 = vmatprep.subr.mxu0 0.0
        %615 = vmatpush2.msra.mxu0 0.0
        %616 = vmatprep.subr.mxu0 0.0
        %617 = vmatpush2.msra.mxu0 0.0
        %618 = vmatprep.subr.mxu0 0.0
        %619 = vmatpush2.msra.mxu0 0.0
        %620 = vmatprep.subr.mxu0 0.0
        %621 = vmatpush2.msra.mxu0 0.0
        %622 = vmatprep.subr.mxu0 0.0
        %623 = vmatpush2.msra.mxu0 0.0
        %624 = vmatprep.subr.mxu0 0.0
        %625 = vmatpush2.msra.mxu0 0.0
        %626 = vmatprep.subr.mxu0 0.0
        %627 = vmatpush2.msra.mxu0 0.0
        %628 = vmatprep.subr.mxu0 0.0
        %629 = vmatpush2.msra.mxu0 0.0
        %630 = vmatprep.subr.mxu0 0.0
        %631 = vmatpush2.msra.mxu0 0.0
        %632 = vmatprep.subr.mxu0 0.0
        %633 = vmatpush2.msra.mxu0 0.0
        %634 = vmatprep.subr.mxu0 0.0
        %635 = vmatpush2.msra.mxu0 0.0
        %636 = vmatprep.subr.mxu0 0.0
        %637 = vmatpush2.msra.mxu0 0.0
        %638 = vmatprep.subr.mxu0 0.0
        %639 = vmatpush2.msra.mxu0 0.0
        %640 = vmatprep.subr.mxu0 0.0
        %641 = vmatpush2.msra.mxu0 0.0
        %642 = vmatprep.mubr.f32.mxu0 0.0
        %v643 = vand.u32 %v261, 4294901760
        %644 = vmatmul.mubr.f32.gmra.mxu0 %v643
        %v645 = vpop.f32.mrf.mxu0
        %v646 = vadd.f32 %v569, %v645
        %v647 = vpop.f32.mrf.mxu0
        %648 = vdwg.mxu0
        %649 = vmatprep.subr.mxu0 0.0
        %650 = vmatpush1.msra.mxu0 0.0
        %651 = vmatprep.subr.mxu0 0.0
        %652 = vmatpush1.msra.mxu0 0.0
        %653 = vmatprep.subr.mxu0 0.0
        %654 = vmatpush1.msra.mxu0 0.0
        %655 = vmatprep.subr.mxu0 0.0
        %656 = vmatpush1.msra.mxu0 0.0
        %657 = vmatprep.subr.mxu0 0.0
        %658 = vmatpush1.msra.mxu0 0.0
        %659 = vmatprep.subr.mxu0 0.0
        %660 = vmatpush1.msra.mxu0 0.0
        %661 = vmatprep.subr.mxu0 0.0
        %662 = vmatpush1.msra.mxu0 0.0
        %663 = vmatprep.subr.mxu0 0.0
        %664 = vmatpush1.msra.mxu0 0.0
        %665 = vmatprep.subr.mxu0 0.0
        %666 = vmatpush1.msra.mxu0 0.0
        %667 = vmatprep.subr.mxu0 0.0
        %668 = vmatpush1.msra.mxu0 0.0
        %669 = vmatprep.subr.mxu0 0.0
        %670 = vmatpush1.msra.mxu0 0.0
        %671 = vmatprep.subr.mxu0 0.0
        %672 = vmatpush1.msra.mxu0 0.0
        %673 = vmatprep.subr.mxu0 0.0
        %674 = vmatpush1.msra.mxu0 0.0
        %675 = vmatprep.subr.mxu0 0.0
        %676 = vmatpush1.msra.mxu0 0.0
        %677 = vmatprep.subr.mxu0 0.0
        %v678 = vand.u32 %v258, 4294901760
        %679 = vmatpush1.msra.mxu0 %v678
        %680 = vmatprep.subr.mxu0 0.0
        %v681 = vand.u32 %v257, 4294901760
        %682 = vmatpush1.msra.mxu0 %v681
        %683 = vmatprep.subr.mxu0 0.0
        %684 = vmatpush2.msra.mxu0 0.0
        %685 = vmatprep.subr.mxu0 0.0
        %686 = vmatpush2.msra.mxu0 0.0
        %687 = vmatprep.subr.mxu0 0.0
        %688 = vmatpush2.msra.mxu0 0.0
        %689 = vmatprep.subr.mxu0 0.0
        %690 = vmatpush2.msra.mxu0 0.0
        %691 = vmatprep.subr.mxu0 0.0
        %692 = vmatpush2.msra.mxu0 0.0
        %693 = vmatprep.subr.mxu0 0.0
        %694 = vmatpush2.msra.mxu0 0.0
        %695 = vmatprep.subr.mxu0 0.0
        %696 = vmatpush2.msra.mxu0 0.0
        %697 = vmatprep.subr.mxu0 0.0
        %698 = vmatpush2.msra.mxu0 0.0
        %699 = vmatprep.subr.mxu0 0.0
        %700 = vmatpush2.msra.mxu0 0.0
        %701 = vmatprep.subr.mxu0 0.0
        %702 = vmatpush2.msra.mxu0 0.0
        %703 = vmatprep.subr.mxu0 0.0
        %704 = vmatpush2.msra.mxu0 0.0
        %705 = vmatprep.subr.mxu0 0.0
        %706 = vmatpush2.msra.mxu0 0.0
        %707 = vmatprep.subr.mxu0 0.0
        %708 = vmatpush2.msra.mxu0 0.0
        %709 = vmatprep.subr.mxu0 0.0
        %710 = vmatpush2.msra.mxu0 0.0
        %711 = vmatprep.subr.mxu0 0.0
        %712 = vmatpush2.msra.mxu0 0.0
        %713 = vmatprep.subr.mxu0 0.0
        %714 = vmatpush2.msra.mxu0 0.0
        %715 = vmatprep.mubr.f32.mxu0 0.0
        %v716 = vand.u32 %v261, 4294901760
        %717 = vmatmul.mubr.f32.gmra.mxu0 %v716
        %v718 = vpop.f32.mrf.mxu0
        %v719 = vadd.f32 %v646, %v718
        %v720 = vpop.f32.mrf.mxu0
        %721 = vdwg.mxu0
        %v723 = vsel %vm259, %v247, 0
        %725 = vmatprep.subr.mxu0 0.0
        %726 = vmatpush1.msra.mxu0 0.0
        %727 = vmatprep.subr.mxu0 0.0
        %728 = vmatpush1.msra.mxu0 0.0
        %729 = vmatprep.subr.mxu0 0.0
        %730 = vmatpush1.msra.mxu0 0.0
        %731 = vmatprep.subr.mxu0 0.0
        %732 = vmatpush1.msra.mxu0 0.0
        %733 = vmatprep.subr.mxu0 0.0
        %734 = vmatpush1.msra.mxu0 0.0
        %735 = vmatprep.subr.mxu0 0.0
        %736 = vmatpush1.msra.mxu0 0.0
        %737 = vmatprep.subr.mxu0 0.0
        %738 = vmatpush1.msra.mxu0 0.0
        %739 = vmatprep.subr.mxu0 0.0
        %740 = vmatpush1.msra.mxu0 0.0
        %741 = vmatprep.subr.mxu0 0.0
        %742 = vmatpush1.msra.mxu0 0.0
        %743 = vmatprep.subr.mxu0 0.0
        %744 = vmatpush1.msra.mxu0 0.0
        %745 = vmatprep.subr.mxu0 0.0
        %746 = vmatpush1.msra.mxu0 0.0
        %747 = vmatprep.subr.mxu0 0.0
        %748 = vmatpush1.msra.mxu0 0.0
        %749 = vmatprep.subr.mxu0 0.0
        %750 = vmatpush1.msra.mxu0 0.0
        %751 = vmatprep.subr.mxu0 0.0
        %752 = vmatpush1.msra.mxu0 0.0
        %753 = vmatprep.subr.mxu0 0.0
        %v754 = vand.u32 %v256, 4294901760
        %755 = vmatpush1.msra.mxu0 %v754
        %756 = vmatprep.subr.mxu0 0.0
        %v757 = vand.u32 %v255, 4294901760
        %758 = vmatpush1.msra.mxu0 %v757
        %759 = vmatprep.subr.mxu0 0.0
        %760 = vmatpush2.msra.mxu0 0.0
        %761 = vmatprep.subr.mxu0 0.0
        %762 = vmatpush2.msra.mxu0 0.0
        %763 = vmatprep.subr.mxu0 0.0
        %764 = vmatpush2.msra.mxu0 0.0
        %765 = vmatprep.subr.mxu0 0.0
        %766 = vmatpush2.msra.mxu0 0.0
        %767 = vmatprep.subr.mxu0 0.0
        %768 = vmatpush2.msra.mxu0 0.0
        %769 = vmatprep.subr.mxu0 0.0
        %770 = vmatpush2.msra.mxu0 0.0
        %771 = vmatprep.subr.mxu0 0.0
        %772 = vmatpush2.msra.mxu0 0.0
        %773 = vmatprep.subr.mxu0 0.0
        %774 = vmatpush2.msra.mxu0 0.0
        %775 = vmatprep.subr.mxu0 0.0
        %776 = vmatpush2.msra.mxu0 0.0
        %777 = vmatprep.subr.mxu0 0.0
        %778 = vmatpush2.msra.mxu0 0.0
        %779 = vmatprep.subr.mxu0 0.0
        %780 = vmatpush2.msra.mxu0 0.0
        %781 = vmatprep.subr.mxu0 0.0
        %782 = vmatpush2.msra.mxu0 0.0
        %783 = vmatprep.subr.mxu0 0.0
        %784 = vmatpush2.msra.mxu0 0.0
        %785 = vmatprep.subr.mxu0 0.0
        %786 = vmatpush2.msra.mxu0 0.0
        %787 = vmatprep.subr.mxu0 0.0
        %788 = vmatpush2.msra.mxu0 0.0
        %789 = vmatprep.subr.mxu0 0.0
        %790 = vmatpush2.msra.mxu0 0.0
        %791 = vmatprep.mubr.f32.mxu0 0.0
        %v792 = vand.u32 %v723, 4294901760
        %v793 = vsub.f32 %v723, %v792
        %v794 = vand.u32 %v793, 4294901760
        %v795 = vsub.f32 %v793, %v794
        %v796 = vand.u32 %v795, 4294901760
        %797 = vmatmul.mubr.f32.gmra.mxu0 %v796
        %v798 = vpop.f32.mrf.mxu0
        %v799 = vadd.f32 %v719, %v798
        %v800 = vpop.f32.mrf.mxu0
        %801 = vdwg.mxu0
        %802 = vmatprep.subr.mxu0 0.0
        %803 = vmatpush1.msra.mxu0 0.0
        %804 = vmatprep.subr.mxu0 0.0
        %805 = vmatpush1.msra.mxu0 0.0
        %806 = vmatprep.subr.mxu0 0.0
        %807 = vmatpush1.msra.mxu0 0.0
        %808 = vmatprep.subr.mxu0 0.0
        %809 = vmatpush1.msra.mxu0 0.0
        %810 = vmatprep.subr.mxu0 0.0
        %811 = vmatpush1.msra.mxu0 0.0
        %812 = vmatprep.subr.mxu0 0.0
        %813 = vmatpush1.msra.mxu0 0.0
        %814 = vmatprep.subr.mxu0 0.0
        %815 = vmatpush1.msra.mxu0 0.0
        %816 = vmatprep.subr.mxu0 0.0
        %817 = vmatpush1.msra.mxu0 0.0
        %818 = vmatprep.subr.mxu0 0.0
        %819 = vmatpush1.msra.mxu0 0.0
        %820 = vmatprep.subr.mxu0 0.0
        %821 = vmatpush1.msra.mxu0 0.0
        %822 = vmatprep.subr.mxu0 0.0
        %823 = vmatpush1.msra.mxu0 0.0
        %824 = vmatprep.subr.mxu0 0.0
        %825 = vmatpush1.msra.mxu0 0.0
        %826 = vmatprep.subr.mxu0 0.0
        %827 = vmatpush1.msra.mxu0 0.0
        %828 = vmatprep.subr.mxu0 0.0
        %829 = vmatpush1.msra.mxu0 0.0
        %830 = vmatprep.subr.mxu0 0.0
        %v831 = vand.u32 %v256, 4294901760
        %v832 = vsub.f32 %v256, %v831
        %v833 = vand.u32 %v832, 4294901760
        %v834 = vsub.f32 %v832, %v833
        %v835 = vand.u32 %v834, 4294901760
        %836 = vmatpush1.msra.mxu0 %v835
        %837 = vmatprep.subr.mxu0 0.0
        %v838 = vand.u32 %v255, 4294901760
        %v839 = vsub.f32 %v255, %v838
        %v840 = vand.u32 %v839, 4294901760
        %v841 = vsub.f32 %v839, %v840
        %v842 = vand.u32 %v841, 4294901760
        %843 = vmatpush1.msra.mxu0 %v842
        %844 = vmatprep.subr.mxu0 0.0
        %845 = vmatpush2.msra.mxu0 0.0
        %846 = vmatprep.subr.mxu0 0.0
        %847 = vmatpush2.msra.mxu0 0.0
        %848 = vmatprep.subr.mxu0 0.0
        %849 = vmatpush2.msra.mxu0 0.0
        %850 = vmatprep.subr.mxu0 0.0
        %851 = vmatpush2.msra.mxu0 0.0
        %852 = vmatprep.subr.mxu0 0.0
        %853 = vmatpush2.msra.mxu0 0.0
        %854 = vmatprep.subr.mxu0 0.0
        %855 = vmatpush2.msra.mxu0 0.0
        %856 = vmatprep.subr.mxu0 0.0
        %857 = vmatpush2.msra.mxu0 0.0
        %858 = vmatprep.subr.mxu0 0.0
        %859 = vmatpush2.msra.mxu0 0.0
        %860 = vmatprep.subr.mxu0 0.0
        %861 = vmatpush2.msra.mxu0 0.0
        %862 = vmatprep.subr.mxu0 0.0
        %863 = vmatpush2.msra.mxu0 0.0
        %864 = vmatprep.subr.mxu0 0.0
        %865 = vmatpush2.msra.mxu0 0.0
        %866 = vmatprep.subr.mxu0 0.0
        %867 = vmatpush2.msra.mxu0 0.0
        %868 = vmatprep.subr.mxu0 0.0
        %869 = vmatpush2.msra.mxu0 0.0
        %870 = vmatprep.subr.mxu0 0.0
        %871 = vmatpush2.msra.mxu0 0.0
        %872 = vmatprep.subr.mxu0 0.0
        %873 = vmatpush2.msra.mxu0 0.0
        %874 = vmatprep.subr.mxu0 0.0
        %875 = vmatpush2.msra.mxu0 0.0
        %876 = vmatprep.mubr.f32.mxu0 0.0
        %v877 = vand.u32 %v723, 4294901760
        %878 = vmatmul.mubr.f32.gmra.mxu0 %v877
        %v879 = vpop.f32.mrf.mxu0
        %v880 = vadd.f32 %v799, %v879
        %v881 = vpop.f32.mrf.mxu0
        %882 = vdwg.mxu0
        %883 = vmatprep.subr.mxu0 0.0
        %884 = vmatpush1.msra.mxu0 0.0
        %885 = vmatprep.subr.mxu0 0.0
        %886 = vmatpush1.msra.mxu0 0.0
        %887 = vmatprep.subr.mxu0 0.0
        %888 = vmatpush1.msra.mxu0 0.0
        %889 = vmatprep.subr.mxu0 0.0
        %890 = vmatpush1.msra.mxu0 0.0
        %891 = vmatprep.subr.mxu0 0.0
        %892 = vmatpush1.msra.mxu0 0.0
        %893 = vmatprep.subr.mxu0 0.0
        %894 = vmatpush1.msra.mxu0 0.0
        %895 = vmatprep.subr.mxu0 0.0
        %896 = vmatpush1.msra.mxu0 0.0
        %897 = vmatprep.subr.mxu0 0.0
        %898 = vmatpush1.msra.mxu0 0.0
        %899 = vmatprep.subr.mxu0 0.0
        %900 = vmatpush1.msra.mxu0 0.0
        %901 = vmatprep.subr.mxu0 0.0
        %902 = vmatpush1.msra.mxu0 0.0
        %903 = vmatprep.subr.mxu0 0.0
        %904 = vmatpush1.msra.mxu0 0.0
        %905 = vmatprep.subr.mxu0 0.0
        %906 = vmatpush1.msra.mxu0 0.0
        %907 = vmatprep.subr.mxu0 0.0
        %908 = vmatpush1.msra.mxu0 0.0
        %909 = vmatprep.subr.mxu0 0.0
        %910 = vmatpush1.msra.mxu0 0.0
        %911 = vmatprep.subr.mxu0 0.0
        %v912 = vand.u32 %v256, 4294901760
        %v913 = vsub.f32 %v256, %v912
        %914 = vmatpush1.msra.mxu0 %v913
        %915 = vmatprep.subr.mxu0 0.0
        %v916 = vand.u32 %v255, 4294901760
        %v917 = vsub.f32 %v255, %v916
        %918 = vmatpush1.msra.mxu0 %v917
        %919 = vmatprep.subr.mxu0 0.0
        %920 = vmatpush2.msra.mxu0 0.0
        %921 = vmatprep.subr.mxu0 0.0
        %922 = vmatpush2.msra.mxu0 0.0
        %923 = vmatprep.subr.mxu0 0.0
        %924 = vmatpush2.msra.mxu0 0.0
        %925 = vmatprep.subr.mxu0 0.0
        %926 = vmatpush2.msra.mxu0 0.0
        %927 = vmatprep.subr.mxu0 0.0
        %928 = vmatpush2.msra.mxu0 0.0
        %929 = vmatprep.subr.mxu0 0.0
        %930 = vmatpush2.msra.mxu0 0.0
        %931 = vmatprep.subr.mxu0 0.0
        %932 = vmatpush2.msra.mxu0 0.0
        %933 = vmatprep.subr.mxu0 0.0
        %934 = vmatpush2.msra.mxu0 0.0
        %935 = vmatprep.subr.mxu0 0.0
        %936 = vmatpush2.msra.mxu0 0.0
        %937 = vmatprep.subr.mxu0 0.0
        %938 = vmatpush2.msra.mxu0 0.0
        %939 = vmatprep.subr.mxu0 0.0
        %940 = vmatpush2.msra.mxu0 0.0
        %941 = vmatprep.subr.mxu0 0.0
        %942 = vmatpush2.msra.mxu0 0.0
        %943 = vmatprep.subr.mxu0 0.0
        %944 = vmatpush2.msra.mxu0 0.0
        %945 = vmatprep.subr.mxu0 0.0
        %946 = vmatpush2.msra.mxu0 0.0
        %947 = vmatprep.subr.mxu0 0.0
        %948 = vmatpush2.msra.mxu0 0.0
        %949 = vmatprep.subr.mxu0 0.0
        %950 = vmatpush2.msra.mxu0 0.0
        %951 = vmatprep.mubr.f32.mxu0 0.0
        %v952 = vand.u32 %v723, 4294901760
        %v953 = vsub.f32 %v723, %v952
        %954 = vmatmul.mubr.f32.gmra.mxu0 %v953
        %v955 = vpop.f32.mrf.mxu0
        %v956 = vadd.f32 %v880, %v955
        %v957 = vpop.f32.mrf.mxu0
        %958 = vdwg.mxu0
        %959 = vmatprep.subr.mxu0 0.0
        %960 = vmatpush1.msra.mxu0 0.0
        %961 = vmatprep.subr.mxu0 0.0
        %962 = vmatpush1.msra.mxu0 0.0
        %963 = vmatprep.subr.mxu0 0.0
        %964 = vmatpush1.msra.mxu0 0.0
        %965 = vmatprep.subr.mxu0 0.0
        %966 = vmatpush1.msra.mxu0 0.0
        %967 = vmatprep.subr.mxu0 0.0
        %968 = vmatpush1.msra.mxu0 0.0
        %969 = vmatprep.subr.mxu0 0.0
        %970 = vmatpush1.msra.mxu0 0.0
        %971 = vmatprep.subr.mxu0 0.0
        %972 = vmatpush1.msra.mxu0 0.0
        %973 = vmatprep.subr.mxu0 0.0
        %974 = vmatpush1.msra.mxu0 0.0
        %975 = vmatprep.subr.mxu0 0.0
        %976 = vmatpush1.msra.mxu0 0.0
        %977 = vmatprep.subr.mxu0 0.0
        %978 = vmatpush1.msra.mxu0 0.0
        %979 = vmatprep.subr.mxu0 0.0
        %980 = vmatpush1.msra.mxu0 0.0
        %981 = vmatprep.subr.mxu0 0.0
        %982 = vmatpush1.msra.mxu0 0.0
        %983 = vmatprep.subr.mxu0 0.0
        %984 = vmatpush1.msra.mxu0 0.0
        %985 = vmatprep.subr.mxu0 0.0
        %986 = vmatpush1.msra.mxu0 0.0
        %987 = vmatprep.subr.mxu0 0.0
        %v988 = vand.u32 %v256, 4294901760
        %989 = vmatpush1.msra.mxu0 %v988
        %990 = vmatprep.subr.mxu0 0.0
        %v991 = vand.u32 %v255, 4294901760
        %992 = vmatpush1.msra.mxu0 %v991
        %993 = vmatprep.subr.mxu0 0.0
        %994 = vmatpush2.msra.mxu0 0.0
        %995 = vmatprep.subr.mxu0 0.0
        %996 = vmatpush2.msra.mxu0 0.0
        %997 = vmatprep.subr.mxu0 0.0
        %998 = vmatpush2.msra.mxu0 0.0
        %999 = vmatprep.subr.mxu0 0.0
        %1000 = vmatpush2.msra.mxu0 0.0
        %1001 = vmatprep.subr.mxu0 0.0
        %1002 = vmatpush2.msra.mxu0 0.0
        %1003 = vmatprep.subr.mxu0 0.0
        %1004 = vmatpush2.msra.mxu0 0.0
        %1005 = vmatprep.subr.mxu0 0.0
        %1006 = vmatpush2.msra.mxu0 0.0
        %1007 = vmatprep.subr.mxu0 0.0
        %1008 = vmatpush2.msra.mxu0 0.0
        %1009 = vmatprep.subr.mxu0 0.0
        %1010 = vmatpush2.msra.mxu0 0.0
        %1011 = vmatprep.subr.mxu0 0.0
        %1012 = vmatpush2.msra.mxu0 0.0
        %1013 = vmatprep.subr.mxu0 0.0
        %1014 = vmatpush2.msra.mxu0 0.0
        %1015 = vmatprep.subr.mxu0 0.0
        %1016 = vmatpush2.msra.mxu0 0.0
        %1017 = vmatprep.subr.mxu0 0.0
        %1018 = vmatpush2.msra.mxu0 0.0
        %1019 = vmatprep.subr.mxu0 0.0
        %1020 = vmatpush2.msra.mxu0 0.0
        %1021 = vmatprep.subr.mxu0 0.0
        %1022 = vmatpush2.msra.mxu0 0.0
        %1023 = vmatprep.subr.mxu0 0.0
        %1024 = vmatpush2.msra.mxu0 0.0
        %1025 = vmatprep.mubr.f32.mxu0 0.0
        %v1026 = vand.u32 %v723, 4294901760
        %v1027 = vsub.f32 %v723, %v1026
        %v1028 = vand.u32 %v1027, 4294901760
        %1029 = vmatmul.mubr.f32.gmra.mxu0 %v1028
        %v1030 = vpop.f32.mrf.mxu0
        %v1031 = vadd.f32 %v956, %v1030
        %v1032 = vpop.f32.mrf.mxu0
        %1033 = vdwg.mxu0
        %1034 = vmatprep.subr.mxu0 0.0
        %1035 = vmatpush1.msra.mxu0 0.0
        %1036 = vmatprep.subr.mxu0 0.0
        %1037 = vmatpush1.msra.mxu0 0.0
        %1038 = vmatprep.subr.mxu0 0.0
        %1039 = vmatpush1.msra.mxu0 0.0
        %1040 = vmatprep.subr.mxu0 0.0
        %1041 = vmatpush1.msra.mxu0 0.0
        %1042 = vmatprep.subr.mxu0 0.0
        %1043 = vmatpush1.msra.mxu0 0.0
        %1044 = vmatprep.subr.mxu0 0.0
        %1045 = vmatpush1.msra.mxu0 0.0
        %1046 = vmatprep.subr.mxu0 0.0
        %1047 = vmatpush1.msra.mxu0 0.0
        %1048 = vmatprep.subr.mxu0 0.0
        %1049 = vmatpush1.msra.mxu0 0.0
        %1050 = vmatprep.subr.mxu0 0.0
        %1051 = vmatpush1.msra.mxu0 0.0
        %1052 = vmatprep.subr.mxu0 0.0
        %1053 = vmatpush1.msra.mxu0 0.0
        %1054 = vmatprep.subr.mxu0 0.0
        %1055 = vmatpush1.msra.mxu0 0.0
        %1056 = vmatprep.subr.mxu0 0.0
        %1057 = vmatpush1.msra.mxu0 0.0
        %1058 = vmatprep.subr.mxu0 0.0
        %1059 = vmatpush1.msra.mxu0 0.0
        %1060 = vmatprep.subr.mxu0 0.0
        %1061 = vmatpush1.msra.mxu0 0.0
        %1062 = vmatprep.subr.mxu0 0.0
        %v1063 = vand.u32 %v256, 4294901760
        %v1064 = vsub.f32 %v256, %v1063
        %v1065 = vand.u32 %v1064, 4294901760
        %1066 = vmatpush1.msra.mxu0 %v1065
        %1067 = vmatprep.subr.mxu0 0.0
        %v1068 = vand.u32 %v255, 4294901760
        %v1069 = vsub.f32 %v255, %v1068
        %v1070 = vand.u32 %v1069, 4294901760
        %1071 = vmatpush1.msra.mxu0 %v1070
        %1072 = vmatprep.subr.mxu0 0.0
        %1073 = vmatpush2.msra.mxu0 0.0
        %1074 = vmatprep.subr.mxu0 0.0
        %1075 = vmatpush2.msra.mxu0 0.0
        %1076 = vmatprep.subr.mxu0 0.0
        %1077 = vmatpush2.msra.mxu0 0.0
        %1078 = vmatprep.subr.mxu0 0.0
        %1079 = vmatpush2.msra.mxu0 0.0
        %1080 = vmatprep.subr.mxu0 0.0
        %1081 = vmatpush2.msra.mxu0 0.0
        %1082 = vmatprep.subr.mxu0 0.0
        %1083 = vmatpush2.msra.mxu0 0.0
        %1084 = vmatprep.subr.mxu0 0.0
        %1085 = vmatpush2.msra.mxu0 0.0
        %1086 = vmatprep.subr.mxu0 0.0
        %1087 = vmatpush2.msra.mxu0 0.0
        %1088 = vmatprep.subr.mxu0 0.0
        %1089 = vmatpush2.msra.mxu0 0.0
        %1090 = vmatprep.subr.mxu0 0.0
        %1091 = vmatpush2.msra.mxu0 0.0
        %1092 = vmatprep.subr.mxu0 0.0
        %1093 = vmatpush2.msra.mxu0 0.0
        %1094 = vmatprep.subr.mxu0 0.0
        %1095 = vmatpush2.msra.mxu0 0.0
        %1096 = vmatprep.subr.mxu0 0.0
        %1097 = vmatpush2.msra.mxu0 0.0
        %1098 = vmatprep.subr.mxu0 0.0
        %1099 = vmatpush2.msra.mxu0 0.0
        %1100 = vmatprep.subr.mxu0 0.0
        %1101 = vmatpush2.msra.mxu0 0.0
        %1102 = vmatprep.subr.mxu0 0.0
        %1103 = vmatpush2.msra.mxu0 0.0
        %1104 = vmatprep.mubr.f32.mxu0 0.0
        %v1105 = vand.u32 %v723, 4294901760
        %1106 = vmatmul.mubr.f32.gmra.mxu0 %v1105
        %v1107 = vpop.f32.mrf.mxu0
        %v1108 = vadd.f32 %v1031, %v1107
        %v1109 = vpop.f32.mrf.mxu0
        %1110 = vdwg.mxu0
        %1111 = vmatprep.subr.mxu0 0.0
        %1112 = vmatpush1.msra.mxu0 0.0
        %1113 = vmatprep.subr.mxu0 0.0
        %1114 = vmatpush1.msra.mxu0 0.0
        %1115 = vmatprep.subr.mxu0 0.0
        %1116 = vmatpush1.msra.mxu0 0.0
        %1117 = vmatprep.subr.mxu0 0.0
        %1118 = vmatpush1.msra.mxu0 0.0
        %1119 = vmatprep.subr.mxu0 0.0
        %1120 = vmatpush1.msra.mxu0 0.0
        %1121 = vmatprep.subr.mxu0 0.0
        %1122 = vmatpush1.msra.mxu0 0.0
        %1123 = vmatprep.subr.mxu0 0.0
        %1124 = vmatpush1.msra.mxu0 0.0
        %1125 = vmatprep.subr.mxu0 0.0
        %1126 = vmatpush1.msra.mxu0 0.0
        %1127 = vmatprep.subr.mxu0 0.0
        %1128 = vmatpush1.msra.mxu0 0.0
        %1129 = vmatprep.subr.mxu0 0.0
        %1130 = vmatpush1.msra.mxu0 0.0
        %1131 = vmatprep.subr.mxu0 0.0
        %1132 = vmatpush1.msra.mxu0 0.0
        %1133 = vmatprep.subr.mxu0 0.0
        %1134 = vmatpush1.msra.mxu0 0.0
        %1135 = vmatprep.subr.mxu0 0.0
        %1136 = vmatpush1.msra.mxu0 0.0
        %1137 = vmatprep.subr.mxu0 0.0
        %1138 = vmatpush1.msra.mxu0 0.0
        %1139 = vmatprep.subr.mxu0 0.0
        %v1140 = vand.u32 %v256, 4294901760
        %1141 = vmatpush1.msra.mxu0 %v1140
        %1142 = vmatprep.subr.mxu0 0.0
        %v1143 = vand.u32 %v255, 4294901760
        %1144 = vmatpush1.msra.mxu0 %v1143
        %1145 = vmatprep.subr.mxu0 0.0
        %1146 = vmatpush2.msra.mxu0 0.0
        %1147 = vmatprep.subr.mxu0 0.0
        %1148 = vmatpush2.msra.mxu0 0.0
        %1149 = vmatprep.subr.mxu0 0.0
        %1150 = vmatpush2.msra.mxu0 0.0
        %1151 = vmatprep.subr.mxu0 0.0
        %1152 = vmatpush2.msra.mxu0 0.0
        %1153 = vmatprep.subr.mxu0 0.0
        %1154 = vmatpush2.msra.mxu0 0.0
        %1155 = vmatprep.subr.mxu0 0.0
        %1156 = vmatpush2.msra.mxu0 0.0
        %1157 = vmatprep.subr.mxu0 0.0
        %1158 = vmatpush2.msra.mxu0 0.0
        %1159 = vmatprep.subr.mxu0 0.0
        %1160 = vmatpush2.msra.mxu0 0.0
        %1161 = vmatprep.subr.mxu0 0.0
        %1162 = vmatpush2.msra.mxu0 0.0
        %1163 = vmatprep.subr.mxu0 0.0
        %1164 = vmatpush2.msra.mxu0 0.0
        %1165 = vmatprep.subr.mxu0 0.0
        %1166 = vmatpush2.msra.mxu0 0.0
        %1167 = vmatprep.subr.mxu0 0.0
        %1168 = vmatpush2.msra.mxu0 0.0
        %1169 = vmatprep.subr.mxu0 0.0
        %1170 = vmatpush2.msra.mxu0 0.0
        %1171 = vmatprep.subr.mxu0 0.0
        %1172 = vmatpush2.msra.mxu0 0.0
        %1173 = vmatprep.subr.mxu0 0.0
        %1174 = vmatpush2.msra.mxu0 0.0
        %1175 = vmatprep.subr.mxu0 0.0
        %1176 = vmatpush2.msra.mxu0 0.0
        %1177 = vmatprep.mubr.f32.mxu0 0.0
        %v1178 = vand.u32 %v723, 4294901760
        %1179 = vmatmul.mubr.f32.gmra.mxu0 %v1178
        %v1180 = vpop.f32.mrf.mxu0
        %v1181 = vadd.f32 %v1108, %v1180
        %v1182 = vpop.f32.mrf.mxu0
        %1183 = vdwg.mxu0
        %1184 = vst.msk [vmem:[%s235] sm:$0xff] %vm259, %v1181
        %s1185 = sand.u32 %s125, 1
        %s1186 = scalar_lea.sflag [#allocation4], %s1185
        %s1187 = sand.u32 %s125, 1
        %s1188 = smul.addr %s1187, 8
        %s1189 = scalar_lea.vmem [#allocation5], %s1188
        // Predicated region
        $region37: #{tpu_custom_call.1} parent=31 // pred_check
          %p1190 = pneg %p135
        $region38: #{tpu_custom_call.1} parent=31 // pred_check_branch
          %1192 = sbr.rel (%p1190) target = $region40
        $region39: #{tpu_custom_call.1} parent=31 // pred_region
          %s1194 = ssub.s32 128, 128
          %1195 = vsyncadd %s1186, %s1194
          %s1196 = sadd.s32 %s25, %s24
          %s1197 = smul.addr %s1196, 128
          %s1198 = scalar_lea.hbm %s3, %s1197
          %s1200 = sshll.u32 %s1189, 4
          %s1201 = int_to_ptr.vmem [resolvable:$true] %s1200
          %1203 = dma.vmem_to_hbm [thread:$0]  %s1201, 128, %s1198, %s1186
        $region40: #{tpu_custom_call.1} parent=31 // pred_fallthru
          _
      $region32: #{tpu_custom_call.1} parent=5 // pred_fallthru
        _
      %p1204 = scmp.le.s32.totalorder 2, %s15
      // Predicated region
      $region41: #{tpu_custom_call.1} parent=5 // pred_check
        %p1205 = pneg %p1204
      $region42: #{tpu_custom_call.1} parent=5 // pred_check_branch
        %1207 = sbr.rel (%p1205) target = $region44
      $region43: #{tpu_custom_call.1} parent=5 // pred_region
        %s1208 = ssub.s32 %s15, 2
        // Predicated region
        $region45: #{tpu_custom_call.1} parent=43 // pred_check
          %p1209 = pneg %p141
        $region46: #{tpu_custom_call.1} parent=43 // pred_check_branch
          %1211 = sbr.rel (%p1209) target = $region48
        $region47: #{tpu_custom_call.1} parent=43 // pred_region
          %s1212 = sand.u32 %s126, 1
          %s1213 = scalar_lea.sflag [#allocation4], %s1212
          %s1214 = sand.u32 %s126, 1
          %s1215 = smul.addr %s1214, 8
          %s1216 = scalar_lea.vmem [#allocation5], %s1215
          %1217 = dma.done %s1213, 128
        $region48: #{tpu_custom_call.1} parent=43 // pred_fallthru
          _
      $region44: #{tpu_custom_call.1} parent=5 // pred_fallthru
        _
    $region6: #{tpu_custom_call.1} parent=1 // loop_footer
      %s19 = sadd.s32 1, %s15
    $region7: #{tpu_custom_call.1} parent=1 // loop_footer_branch
      %14 = sbr.rel target = $region3
    $region8: #{tpu_custom_call.1} parent=1 // loop_exit
      _
    %1218 = vsyncpa [#allocation3], 1
    %s1219 = scalar_lea.sflag [#allocation3], 1
    %1220 = vsyncpa %s1219, 1
    %1221 = vsyncpa [#allocation4], 1
    %s1222 = scalar_lea.sflag [#allocation4], 1
    %1223 = vsyncpa %s1222, 1

</llo_original>
